<compile_context>
chip_gen: v6e
topology: v6e:2x2x1
jax: 0.10.0
libtpu: 0.0.40
codegen_flags: <defaults>
</compile_context>

<pallas_src>
import jax
import jax.numpy as jnp
import numpy as np
from jax import lax
from jax.experimental import pallas as pl
from jax.experimental.pallas import tpu as pltpu

A = 20200.0 / 10000
B = 201.0 / 10000
C = 20201.0 / 10000
_C_MINUS_A = C - A          # 1e-4   (computed in float64 at trace time)
_C_PLUS_A = C + A           # 4.0401


# ---------------------------------------------------------------------------
# Kernel bodies
# ---------------------------------------------------------------------------
def _grouped_log_sum(ratio):
    """sum(log(ratio), axis=1, keepdims=True) with ~8x fewer EUP log pushes.

    Multiplies groups of <=8 consecutive 128-lane slabs elementwise, then takes
    one log per group (log of product == sum of logs). ratio is in
    (1, C/sqrt(C^2-A^2) ~= 100.5], so 8-way products stay < ~1e16 (f32-safe).
    """
    _, tn = ratio.shape
    if tn % 128 == 0 and tn >= 256:
        ncols = tn // 128
        g = min(8, ncols)
        log_acc = None
        for start in range(0, ncols, g):
            end = min(start + g, ncols)
            p = ratio[:, start * 128:(start + 1) * 128]
            for k in range(start + 1, end):
                p = p * ratio[:, k * 128:(k + 1) * 128]
            lp = jnp.log(p)
            log_acc = lp if log_acc is None else log_acc + lp
        return jnp.sum(log_acc, axis=1, keepdims=True)
    return jnp.sum(jnp.log(ratio), axis=1, keepdims=True)


def _compute_block(x, out_dtype):
    """Shared per-block math. Returns (y_block, logdet_partial (tb, 1) f32)."""
    xf = x.astype(jnp.float32)
    ax = jnp.abs(xf)
    t = ax + jnp.float32(C)                                  # |x| + C  (> A)
    # (|x|+C)^2 - A^2 == (|x| + (C-A)) * (|x| + (C+A)): no cancellation at x~0.
    u = (ax + jnp.float32(_C_MINUS_A)) * (ax + jnp.float32(_C_PLUS_A))
    rs = lax.rsqrt(u)                                        # single EUP pass
    r = u * rs                                               # sqrt(u)
    ymag = r - jnp.float32(B)

    # y = sign(x) * ymag via a sign-bit splice (2 VPU bit ops vs sign + mul).
    sbit = pltpu.bitcast(xf, jnp.uint32) & jnp.uint32(0x80000000)
    y = pltpu.bitcast(pltpu.bitcast(ymag, jnp.uint32) | sbit, jnp.float32)

    # log|derInv| = log((|x|+C) / sqrt(u)) = log(t * rsqrt(u));  t, u > 0.
    partial = _grouped_log_sum(t * rs)
    return y.astype(out_dtype), partial


def _back_layer_kernel_full(x_ref, y_ref, s_ref):
    """Full-N block: no inner grid axis, no accumulator."""
    y, partial = _compute_block(x_ref[...], y_ref.dtype)
    y_ref[...] = y
    s_ref[...] = partial


def _back_layer_kernel_tiled(x_ref, y_ref, s_ref):
    """Feature-tiled path: accumulate logdet directly into the resident
    output block (s index_map is constant along the 'arbitrary' axis)."""
    y, partial = _compute_block(x_ref[...], y_ref.dtype)
    y_ref[...] = y

    @pl.when(pl.program_id(1) == 0)
    def _init():
        s_ref[...] = jnp.zeros_like(s_ref)

    s_ref[...] += partial


# ---------------------------------------------------------------------------
# Tiling heuristics
# ---------------------------------------------------------------------------
def _auto_tn(n, itemsize, row_gran, target_block_bytes):
    """Full N unless even a minimal (row_gran, N) slab exceeds the budget."""
    tn = n
    if n % 128 == 0:
        while tn % 256 == 0 and row_gran * tn * itemsize > target_block_bytes:
            tn //= 2
    return tn


def _auto_tb(batch, tn, itemsize, row_gran, target_block_bytes):
    """Pick (tb, padded_batch). Minimizes padding, respects the block budget,
    and prefers >= 4 batch grid steps (>= 2 per v7x TensorCore) when blocks
    stay >= 1 MiB."""
    cap = max(row_gran,
              (target_block_bytes // (tn * itemsize)) // row_gran * row_gran)

    if batch % row_gran != 0 and batch <= cap:
        # Whole (odd) batch in one full-dim block: exempt from the (8, 128)
        # divisibility rule, and no jnp.pad copy of x at all.
        return batch, batch

    padded_b = -(-batch // row_gran) * row_gran      # pad only to next mult of 8/16
    limit = min(cap, padded_b)
    divisors = [d for d in range(row_gran, limit + 1, row_gran)
                if padded_b % d == 0]
    tb = max(divisors)                               # row_gran always qualifies
    if padded_b // tb < 4:
        for d in sorted(divisors, reverse=True):
            if padded_b // d >= 4 and d * tn * itemsize >= (1 << 20):
                tb = d
                break
    return tb, padded_b


# ---------------------------------------------------------------------------
# Wrapper
# ---------------------------------------------------------------------------
def back_layer_forward(x, *, tb=None, tn=None, target_block_bytes=4 << 20):
    """x: (B, N) float (f32 or bf16). Returns (y, logdet): y (B, N) in x.dtype,
    logdet (B,) float32."""
    batch, n = x.shape
    itemsize = x.dtype.itemsize
    row_gran = 16 if itemsize <= 2 else 8            # bf16 min tile is (16, 128)

    if tn is None:
        tn = _auto_tn(n, itemsize, row_gran, target_block_bytes)
    assert tn == n or (tn % 128 == 0 and n % tn == 0), "bad feature tile"

    if tb is None:
        tb, padded_b = _auto_tb(batch, tn, itemsize, row_gran, target_block_bytes)
    else:
        padded_b = batch if tb == batch else -(-batch // tb) * tb
        assert tb == padded_b or tb % row_gran == 0, "bad batch tile"

    # Only pads when the batch must be tiled AND is not already a multiple of
    # 8/16 (rare); padding is then at most row_gran - 1 rows. Zeros are safe
    # (u(0) > 0) and padded rows are sliced off below.
    xp = x if padded_b == batch else jnp.pad(x, ((0, padded_b - batch), (0, 0)))

    block_bytes = tb * tn * itemsize
    # Double-buffered x block + y block (+ tiny logdet block); add headroom,
    # stay well under v7x's 64 MiB physical VMEM.
    vmem_limit = int(min(max(4 * block_bytes + (4 << 20), 16 << 20), 48 << 20))

    if tn == n:
        grid = (padded_b // tb,)
        kernel = _back_layer_kernel_full
        in_specs = [pl.BlockSpec((tb, n), lambda i: (i, 0))]
        out_specs = [pl.BlockSpec((tb, n), lambda i: (i, 0)),
                     pl.BlockSpec((tb, 1), lambda i: (i, 0))]
        dim_sem = ("parallel",)
    else:
        grid = (padded_b // tb, n // tn)
        kernel = _back_layer_kernel_tiled
        in_specs = [pl.BlockSpec((tb, tn), lambda i, j: (i, j))]
        out_specs = [pl.BlockSpec((tb, tn), lambda i, j: (i, j)),
                     pl.BlockSpec((tb, 1), lambda i, j: (i, 0))]
        dim_sem = ("parallel", "arbitrary")

    y, s = pl.pallas_call(
        kernel,
        out_shape=(
            jax.ShapeDtypeStruct((padded_b, n), x.dtype),
            jax.ShapeDtypeStruct((padded_b, 1), jnp.float32),
        ),
        grid_spec=pltpu.PrefetchScalarGridSpec(
            num_scalar_prefetch=0,
            grid=grid,
            in_specs=in_specs,
            out_specs=out_specs,
        ),
        compiler_params=pltpu.CompilerParams(
            dimension_semantics=dim_sem,
            vmem_limit_bytes=vmem_limit,
        ),
    )(xp)

    y_out = y if padded_b == batch else y[:batch]
    return y_out, s[:batch, 0]


# ---------------------------------------------------------------------------
# float64 reference (numpy, host-side) — matches the PyTorch formulas
# ---------------------------------------------------------------------------
def _reference_f64(x):
    xd = np.asarray(x, dtype=np.float64)
    ax = np.abs(xd)
    t = ax + C
    r = np.sqrt(t * t - A * A)
    y = (r - B) * np.sign(xd)
    logdet = np.sum(np.log(np.abs(t / r)), axis=1)
    return y, logdet


if __name__ == "__main__":
    key = jax.random.PRNGKey(0)
    k1, k2, k3 = jax.random.split(key, 3)

    def check(y, ld, x):
        y_ref, ld_ref = _reference_f64(x)
        assert np.allclose(np.asarray(y, np.float64), y_ref, atol=1e-4, rtol=1e-5)
        assert np.allclose(np.asarray(ld, np.float64), ld_ref, atol=1e-3, rtol=1e-4)

    # Case 1: full-N kernel + grouped-log path (2 lane slabs); includes x at /
    # near 0 to exercise the cancellation-free u formula and the sign splice.
    x1 = jax.random.normal(k1, (8, 256), dtype=jnp.float32)
    x1 = x1.at[0, 0].set(0.0).at[0, 1].set(1e-6).at[0, 2].set(-1e-6).at[0, 3].set(1e-3)
    y1, ld1 = back_layer_forward(x1)
    jax.block_until_ready((y1, ld1))
    assert y1.shape == (8, 256) and ld1.shape == (8,)
    check(y1, ld1, x1)

    # Case 2: odd batch (70) -> full-dim batch block, zero padding; tn=128
    # override exercises the feature-tiled accumulator kernel.
    x2 = jax.random.normal(k2, (70, 256), dtype=jnp.float32)
    y2, ld2 = back_layer_forward(x2, tn=128)
    jax.block_until_ready((y2, ld2))
    assert y2.shape == (70, 256) and ld2.shape == (70,)
    check(y2, ld2, x2)

    # Case 3: multi-step "parallel" batch grid (4 blocks of 16 rows).
    x3 = jax.random.normal(k3, (64, 128), dtype=jnp.float32)
    y3, ld3 = back_layer_forward(x3, tb=16)
    jax.block_until_ready((y3, ld3))
    assert y3.shape == (64, 128) and ld3.shape == (64,)
    check(y3, ld3, x3)

    # TODO(synk): backLayer.pushback (inverse direction) is not part of forward()
    # and is not implemented here.
    print("KERNEL_OK")
</pallas_src>

<mosaic_0001>
module attributes {stable_mosaic.version = 11 : i64} {
  func.func @_back_layer_kernel_full(%arg0: i32, %arg1: memref<8x256xf32, #tpu.memory_space<vmem>>, %arg2: memref<8x256xf32, #tpu.memory_space<vmem>>, %arg3: memref<8x1xf32, #tpu.memory_space<vmem>>) attributes {dimension_semantics = [#tpu.dimension_semantics<parallel>], iteration_bounds = array<i64: 1>, scalar_prefetch = 0 : i64, scratch_operands = 0 : i64, tpu.core_type = #tpu.core_type<tc>, window_params = [{transform_indices = @transform_0, window_bounds = array<i64: 8, 256>}, {transform_indices = @transform_1, window_bounds = array<i64: 8, 256>}, {transform_indices = @transform_2, window_bounds = array<i64: 8, 1>}]} {
    %c0 = arith.constant 0 : index
    %c0_0 = arith.constant 0 : index
    %0 = vector.load %arg1[%c0, %c0_0] : memref<8x256xf32, #tpu.memory_space<vmem>>, vector<8x256xf32>
    %1 = math.absf %0 : vector<8x256xf32>
    %cst = arith.constant 2.020100e+00 : f32
    %2 = vector.broadcast %cst : f32 to vector<8x256xf32>
    %3 = arith.addf %1, %2 : vector<8x256xf32>
    %cst_1 = arith.constant 9.99999974E-5 : f32
    %4 = vector.broadcast %cst_1 : f32 to vector<8x256xf32>
    %5 = arith.addf %1, %4 : vector<8x256xf32>
    %cst_2 = arith.constant 4.040100e+00 : f32
    %6 = vector.broadcast %cst_2 : f32 to vector<8x256xf32>
    %7 = arith.addf %1, %6 : vector<8x256xf32>
    %8 = arith.mulf %5, %7 : vector<8x256xf32>
    %9 = math.rsqrt %8 : vector<8x256xf32>
    %10 = arith.mulf %8, %9 : vector<8x256xf32>
    %cst_3 = arith.constant 2.010000e-02 : f32
    %11 = vector.broadcast %cst_3 : f32 to vector<8x256xf32>
    %12 = arith.subf %10, %11 : vector<8x256xf32>
    %13 = tpu.bitcast %0 : vector<8x256xf32> -> vector<8x256xi32>
    %c-2147483648_i32 = arith.constant -2147483648 : i32
    %14 = vector.broadcast %c-2147483648_i32 : i32 to vector<8x256xi32>
    %15 = arith.andi %13, %14 : vector<8x256xi32>
    %16 = tpu.bitcast %12 : vector<8x256xf32> -> vector<8x256xi32>
    %17 = arith.ori %16, %15 : vector<8x256xi32>
    %18 = tpu.bitcast %17 : vector<8x256xi32> -> vector<8x256xf32>
    %19 = arith.mulf %3, %9 : vector<8x256xf32>
    %20 = vector.extract_strided_slice %19 {offsets = [0, 0], sizes = [8, 128], strides = [1, 1]} : vector<8x256xf32> to vector<8x128xf32>
    %21 = vector.extract_strided_slice %19 {offsets = [0, 128], sizes = [8, 128], strides = [1, 1]} : vector<8x256xf32> to vector<8x128xf32>
    %22 = arith.mulf %20, %21 : vector<8x128xf32>
    %23 = math.log %22 : vector<8x128xf32>
    %cst_4 = arith.constant dense<0.000000e+00> : vector<8xf32>
    %24 = vector.multi_reduction <add>, %23, %cst_4 [1] : vector<8x128xf32> to vector<8xf32>
    %25 = vector.shape_cast %24 : vector<8xf32> to vector<8x1xf32>
    %c0_5 = arith.constant 0 : index
    %c0_6 = arith.constant 0 : index
    %26 = vector.load %arg2[%c0_5, %c0_6] : memref<8x256xf32, #tpu.memory_space<vmem>>, vector<8x256xf32>
    tpu.vector_store %arg2[%c0_5, %c0_6], %18 {strides = array<i32>} : memref<8x256xf32, #tpu.memory_space<vmem>>, vector<8x256xf32>,
    %c0_7 = arith.constant 0 : index
    %c0_8 = arith.constant 0 : index
    %27 = vector.load %arg3[%c0_7, %c0_8] : memref<8x1xf32, #tpu.memory_space<vmem>>, vector<8x1xf32>
    tpu.vector_store %arg3[%c0_7, %c0_8], %25 {strides = array<i32>} : memref<8x1xf32, #tpu.memory_space<vmem>>, vector<8x1xf32>,
    return
  }
  func.func @transform_0(%arg0: i32) -> (i32, i32) {
    %c0_i32 = arith.constant 0 : i32
    %c0_i32_0 = arith.constant 0 : i32
    return %arg0, %c0_i32 : i32, i32
  }
  func.func @transform_1(%arg0: i32) -> (i32, i32) {
    %c0_i32 = arith.constant 0 : i32
    %c0_i32_0 = arith.constant 0 : i32
    return %arg0, %c0_i32 : i32, i32
  }
  func.func @transform_2(%arg0: i32) -> (i32, i32) {
    %c0_i32 = arith.constant 0 : i32
    %c0_i32_0 = arith.constant 0 : i32
    return %arg0, %c0_i32 : i32, i32
  }
}

</mosaic_0001>

<llo_original>
// kernel: tpu_custom_call.1
$region0: #{tpu_custom_call.1}
  #allocation0 [shape = 'u32[]', space=smem, size = 0x4, offset = 0x4, fixed_abs, tag = 'smem constant byte address 0x4 - core index']
  #allocation1 [shape = 'u32[144,128]{1,0:T(1,128)}', space=vmem, size = 0x12000, scoped, tag = 'internal scratch']
  %s0 = inlined_call_operand.hbm [shape: f32[8,256], index: 0, kind: input, shape index: {}]
  %s1 = inlined_call_operand.hbm [shape: f32[8,256], index: 1, kind: output, shape index: {0}]
  %s2 = inlined_call_operand.vmem [shape: f32[8,1], index: 2, kind: output, shape index: {1}]
  %3 = xla_tuple %s1, %s2
  %s4 = sld [smem:[#allocation0]]
  $region26: #{tpu_custom_call.1} parent=0
    _
  %s6 = ssub.s32 1, %s4
  %s7 = scalar_select 0, %s6, %s4
  $region1: #{tpu_custom_call.1} parent=0
    #allocation2 [shape = 'u8[8192]{0}', space=vmem, size = 0x2000, scoped, tag = 'input window, operand 0, single buffered']
    #allocation3 [shape = 's32[1]{0}', space=sflag, size = 0x4, scoped, tag = 'scoped memory for tpu_custom_call.1']
    #allocation4 [shape = 's32[1]{0}', space=sflag, size = 0x4, scoped, tag = 'scoped memory for tpu_custom_call.1']
    #allocation5 [shape = 'u8[8192]{0}', space=vmem, size = 0x2000, scoped, tag = 'output window, operand 0, single buffered']
    %8 = vsyncpa [#allocation3], 0
    %9 = vsyncpa [#allocation4], 0
    // Predicated region
    $region2: #{tpu_custom_call.1} parent=1 // pred_check
      _
    $region3: #{tpu_custom_call.1} parent=1 // pred_check_branch
      %11 = sbr.rel (0) target = $region5
    $region4: #{tpu_custom_call.1} parent=1 // pred_region
      %s13 = ssub.s32 256, 256
      %14 = vsyncadd [#allocation3], %s13
      %s16 = sshll.u32 [#allocation2], 4
      %s17 = int_to_ptr.vmem [resolvable:$true] %s16
      %19 = dma.hbm_to_vmem [thread:$0]  %s0, 256, %s17, [#allocation3]
    $region5: #{tpu_custom_call.1} parent=1 // pred_fallthru
      _
    // Predicated region
    $region6: #{tpu_custom_call.1} parent=1 // pred_check
      _
    $region7: #{tpu_custom_call.1} parent=1 // pred_check_branch
      %21 = sbr.rel (0) target = $region9
    $region8: #{tpu_custom_call.1} parent=1 // pred_region
      %22 = dma.done [#allocation3], 256
    $region9: #{tpu_custom_call.1} parent=1 // pred_fallthru
      _
    %v23 = vld [vmem:[#allocation2] sm:$0xff]
    %v24 = vld [vmem:[#allocation2 + $0x8] sm:$0xff]
    %v25 = vand.u32 2147483647, %v23
    %v26 = vand.u32 2147483647, %v24
    %v27 = vadd.f32 %v25, 2.0201
    %v28 = vadd.f32 %v26, 2.0201
    %v29 = vadd.f32 %v25, 0.0001
    %v30 = vadd.f32 %v26, 0.0001
    %v31 = vadd.f32 %v25, 4.0401
    %v32 = vadd.f32 %v26, 4.0401
    %v33 = vmul.f32 %v29, %v31
    %v34 = vmul.f32 %v30, %v32
    %v35 = vrsqrt.pop %v33
    %v36 = vrsqrt.pop %v34
    %v37 = vmul.f32 %v33, %v35
    %v38 = vmul.f32 %v34, %v36
    %v39 = vsub.f32 %v37, 0.0201
    %v40 = vsub.f32 %v38, 0.0201
    %v43 = vand.u32 %v23, 2147483648
    %v44 = vand.u32 %v24, 2147483648
    %v47 = vor.u32 %v39, %v43
    %v48 = vor.u32 %v40, %v44
    %v51 = vmul.f32 %v27, %v35
    %v52 = vmul.f32 %v28, %v36
    %v53 = vmul.f32 %v51, %v52
    %v54 = vlog2.pop %v53
    %v55 = vmul.f32 %v54, 0.6931472
    %56 = vadd.xlane.f32.xlu0 %v55
    %v57 = vpop.xlane.xlu0 %56
    %58 = vst [vmem:[#allocation5] sm:$0xff] %v47
    %59 = vst [vmem:[#allocation5 + $0x8] sm:$0xff] %v48
    %vm60 = vcmask 7168
    %61 = vst.msk [vmem:[%s2] sm:$0xff] %vm60, %v57
    // Predicated region
    $region10: #{tpu_custom_call.1} parent=1 // pred_check
      _
    $region11: #{tpu_custom_call.1} parent=1 // pred_check_branch
      %63 = sbr.rel (0) target = $region13
    $region12: #{tpu_custom_call.1} parent=1 // pred_region
      %s65 = ssub.s32 256, 256
      %66 = vsyncadd [#allocation4], %s65
      %s68 = sshll.u32 [#allocation5], 4
      %s69 = int_to_ptr.vmem [resolvable:$true] %s68
      %71 = dma.vmem_to_hbm [thread:$0]  %s69, 256, %s1, [#allocation4]
    $region13: #{tpu_custom_call.1} parent=1 // pred_fallthru
      _
    // Predicated region
    $region14: #{tpu_custom_call.1} parent=1 // pred_check
      _
    $region15: #{tpu_custom_call.1} parent=1 // pred_check_branch
      %73 = sbr.rel (0) target = $region17
    $region16: #{tpu_custom_call.1} parent=1 // pred_region
      _
    $region17: #{tpu_custom_call.1} parent=1 // pred_fallthru
      _
    // Predicated region
    $region18: #{tpu_custom_call.1} parent=1 // pred_check
      _
    $region19: #{tpu_custom_call.1} parent=1 // pred_check_branch
      %75 = sbr.rel (0) target = $region21
    $region20: #{tpu_custom_call.1} parent=1 // pred_region
      %76 = dma.done [#allocation4], 256
    $region21: #{tpu_custom_call.1} parent=1 // pred_fallthru
      _
    // Predicated region
    $region22: #{tpu_custom_call.1} parent=1 // pred_check
      _
    $region23: #{tpu_custom_call.1} parent=1 // pred_check_branch
      %78 = sbr.rel (0) target = $region25
    $region24: #{tpu_custom_call.1} parent=1 // pred_region
      _
    $region25: #{tpu_custom_call.1} parent=1 // pred_fallthru
      _
    %79 = vsyncpa [#allocation3], 1
    %80 = vsyncpa [#allocation4], 1

</llo_original>
